<compile_context>
chip_gen: v7x
topology: tpu7x:2x2x1
jax: 0.10.0
libtpu: 0.0.40
codegen_flags: <defaults>
</compile_context>

<pallas_src>
import math
from functools import partial
from typing import NamedTuple, Optional

import jax
import jax.numpy as jnp
from jax.experimental import pallas as pl
from jax.experimental.pallas import tpu as pltpu


# ---------------------------------------------------------------------------
# Helpers
# ---------------------------------------------------------------------------
def _round_up(x, m):
    return ((x + m - 1) // m) * m


def _sublane(dtype):
    # rows packed per sublane: f32 -> 8, bf16/f16 -> 16, int8/fp8 -> 32
    bits = jnp.dtype(dtype).itemsize * 8
    if bits >= 32:
        return 8
    if bits == 16:
        return 16
    return 32


def _vmem_budget_bytes():
    """Per-core VMEM budget with headroom, generation aware (v7x: 64 MiB/TC)."""
    phys = 128 * 1024 * 1024
    try:
        info = pltpu.get_tpu_info()
        phys = int(getattr(info, "vmem_capacity_bytes", phys))
    except Exception:
        pass
    return min(int(phys * 3 // 4), 100 * 1024 * 1024)


_TM_CAP = 512
_TN_CAP = 512


def _tk_cap(x_itemsize):
    return 2048 if x_itemsize <= 2 else 1024


def _buffers_bytes(tm, tn, tk, x_item, w_item, out_item, has_bias, acc_scratch):
    need = 2 * tm * tk * x_item          # double-buffered x tiles
    need += 2 * tk * tn * w_item         # double-buffered W tiles
    need += 2 * tm * tn * out_item       # double-buffered output tiles
    if has_bias:
        need += 2 * tn * 4               # f32 bias tile
    if acc_scratch:
        need += tm * tn * 4              # f32 accumulator scratch
    return need


# ---------------------------------------------------------------------------
# One-time weight layout (hoists pad/transpose out of the per-call path)
# ---------------------------------------------------------------------------
class PreparedLinear(NamedTuple):
    w_kn: jax.Array              # (Kp, Np): weight as (K, N), padded to tiles
    bias: Optional[jax.Array]    # (1, Np) f32, or None
    n: int
    k: int
    tn: int
    tk: int


def prepare_linear_params(weight, bias=None, x_dtype=None):
    """weight: (out_features, in_features) PyTorch layout. Done once, reused."""
    N, K = weight.shape
    if x_dtype is None:
        x_dtype = weight.dtype
    x_item = jnp.dtype(x_dtype).itemsize
    w_item = jnp.dtype(weight.dtype).itemsize
    out_item = x_item
    budget = _vmem_budget_bytes()

    tn = min(_TN_CAP, _round_up(N, 128))
    tk = min(_tk_cap(x_item), _round_up(K, 128))
    # Shrink (tk first, then tn) until the double-buffered working set fits.
    while _buffers_bytes(_TM_CAP, tn, tk, x_item, w_item, out_item,
                         bias is not None, True) > budget:
        if tk > 128:
            tk //= 2
        elif tn > 128:
            tn //= 2
        else:
            break

    Kp, Np = _round_up(K, tk), _round_up(N, tn)
    w_kn = weight.T                       # (K, N): MXU-native RHS layout
    if (Kp, Np) != (K, N):
        w_kn = jnp.pad(w_kn, ((0, Kp - K), (0, Np - N)))
    b2 = None
    if bias is not None:
        b2 = bias.astype(jnp.float32).reshape(1, N)
        if Np != N:
            b2 = jnp.pad(b2, ((0, 0), (0, Np - N)))
    return PreparedLinear(w_kn=w_kn, bias=b2, n=N, k=K, tn=tn, tk=tk)


# ---------------------------------------------------------------------------
# Kernel
# ---------------------------------------------------------------------------
def _linear_kernel(*refs, has_bias: bool, acc_in_out: bool):
    # refs: x (tm,tk), w (tk,tn), [bias (1,tn) f32], out (tm,tn), [acc (tm,tn) f32]
    if has_bias:
        if acc_in_out:
            x_ref, w_ref, b_ref, o_ref = refs
            acc_ref = o_ref                      # f32 output tile is the accumulator
        else:
            x_ref, w_ref, b_ref, o_ref, acc_ref = refs
    else:
        b_ref = None
        if acc_in_out:
            x_ref, w_ref, o_ref = refs
            acc_ref = o_ref
        else:
            x_ref, w_ref, o_ref, acc_ref = refs

    k = pl.program_id(2)

    @pl.when(k == 0)
    def _():
        acc_ref[...] = jnp.zeros_like(acc_ref)

    # MXU-native contraction: (tm, tk) @ (tk, tn) -> (tm, tn), f32 accumulate.
    acc_ref[...] += jnp.dot(x_ref[...], w_ref[...],
                            preferred_element_type=jnp.float32)

    if has_bias or not acc_in_out:
        @pl.when(k == pl.num_programs(2) - 1)
        def _():
            res = acc_ref[...]
            if has_bias:
                res = res + b_ref[...]           # (1, tn) f32 broadcast over rows
            o_ref[...] = res.astype(o_ref.dtype)


# ---------------------------------------------------------------------------
# Forward
# ---------------------------------------------------------------------------
def simple_linear_prepared(x, params: PreparedLinear):
    """Pallas equivalent of SimpleLinear.forward with pre-laid-out parameters."""
    orig_shape = x.shape
    K = orig_shape[-1]
    assert K == params.k, "in_features mismatch"
    N = params.n
    tn, tk = params.tn, params.tk
    Kp, Np = params.w_kn.shape

    out_dtype = x.dtype
    x_item = jnp.dtype(x.dtype).itemsize
    w_item = jnp.dtype(params.w_kn.dtype).itemsize
    out_item = jnp.dtype(out_dtype).itemsize
    has_bias = params.bias is not None
    acc_in_out = out_dtype == jnp.float32   # f32 output tile doubles as accumulator

    x2 = x.reshape(-1, K)
    M = x2.shape[0]
    sub = _sublane(x.dtype)
    tm = min(_TM_CAP, _round_up(M, sub))

    # Keep >= 2 parallel output blocks on non-trivial shapes so both v7x
    # TensorCores (megacore "parallel" axes) get work.
    if (_round_up(M, tm) // tm) * (Np // tn) == 1 and M * N * K >= (1 << 22):
        if tn >= 256:
            tn //= 2
        elif tm >= 2 * sub:
            tm //= 2

    Mp = _round_up(M, tm)
    if (Mp, Kp) != (M, K):
        x2 = jnp.pad(x2, ((0, Mp - M), (0, Kp - K)))

    grid = (Mp // tm, Np // tn, Kp // tk)
    grid_m, grid_n, grid_k = grid

    need = _buffers_bytes(tm, tn, tk, x_item, w_item, out_item,
                          has_bias, not acc_in_out)
    budget = _vmem_budget_bytes()
    vmem_limit = int(min(budget, max(2 * need, 32 * 1024 * 1024)))

    cost = pl.CostEstimate(
        flops=2 * M * N * K,
        transcendentals=0,
        bytes_accessed=int(
            grid_n * Mp * Kp * x_item          # x streamed once per N-tile column
            + grid_m * Kp * Np * w_item        # W streamed once per M-tile row
            + Mp * Np * out_item               # output written once
            + (grid_m * Np * 4 if has_bias else 0)
        ),
    )

    x_spec = pl.BlockSpec((tm, tk), lambda i, j, k: (i, k))
    w_spec = pl.BlockSpec((tk, tn), lambda i, j, k: (k, j))
    o_spec = pl.BlockSpec((tm, tn), lambda i, j, k: (i, j))

    in_specs = [x_spec, w_spec]
    operands = [x2, params.w_kn]
    if has_bias:
        in_specs.append(pl.BlockSpec((1, tn), lambda i, j, k: (0, j)))
        operands.append(params.bias)

    scratch_shapes = [] if acc_in_out else [pltpu.VMEM((tm, tn), jnp.float32)]

    out = pl.pallas_call(
        partial(_linear_kernel, has_bias=has_bias, acc_in_out=acc_in_out),
        out_shape=jax.ShapeDtypeStruct((Mp, Np), out_dtype),
        grid_spec=pltpu.PrefetchScalarGridSpec(
            num_scalar_prefetch=0,
            grid=grid,
            in_specs=in_specs,
            out_specs=o_spec,
            scratch_shapes=scratch_shapes,
        ),
        compiler_params=pltpu.CompilerParams(
            dimension_semantics=("parallel", "parallel", "arbitrary"),
            vmem_limit_bytes=vmem_limit,
        ),
        cost_estimate=cost,
    )(*operands)

    out = out[:M, :N].reshape(orig_shape[:-1] + (N,))
    return {"logits": out}


def simple_linear(x, weight, bias=None):
    """Convenience wrapper: weight in PyTorch (out, in) layout, laid out per call.
    For repeated calls, use prepare_linear_params() once and
    simple_linear_prepared() to avoid per-call weight padding/transpose."""
    return simple_linear_prepared(
        x, prepare_linear_params(weight, bias, x_dtype=x.dtype))


# ---------------------------------------------------------------------------
# Init (matches the PyTorch module's reset_parameters)
# ---------------------------------------------------------------------------
def init_params(key, in_features, out_features, dtype=jnp.float32):
    # kaiming_uniform_(nonlinearity='linear'): gain=1, fan_in=in_features,
    # bound = sqrt(3 / fan_in); bias initialized to 0.
    bound = math.sqrt(3.0 / in_features)
    w = jax.random.uniform(
        key, (out_features, in_features), dtype=dtype, minval=-bound, maxval=bound
    )
    b = jnp.zeros((out_features,), dtype=dtype)
    return w, b


if __name__ == "__main__":
    key = jax.random.PRNGKey(0)
    k_x, k_w = jax.random.split(key)

    batch, in_features, out_features = 8, 32, 16
    x = jax.random.normal(k_x, (batch, in_features), dtype=jnp.float32)
    weight, bias = init_params(k_w, in_features, out_features)

    # Recommended path: lay out / pad the weight once, reuse across calls.
    params = prepare_linear_params(weight, bias, x_dtype=x.dtype)
    out = simple_linear_prepared(x, params)
    logits = jax.block_until_ready(out["logits"])
    ref = x @ weight.T + bias
    assert logits.shape == (batch, out_features)
    assert jnp.allclose(logits, ref, atol=1e-5, rtol=1e-5)

    # bias=False module config — exercises the no-bias, f32 accumulate-in-output path.
    out_nb = simple_linear(x, weight, None)
    logits_nb = jax.block_until_ready(out_nb["logits"])
    assert jnp.allclose(logits_nb, x @ weight.T, atol=1e-5, rtol=1e-5)

    # bf16 + 3-D input — exercises the f32-scratch-accumulator variant and reshape.
    x3 = jax.random.normal(k_x, (2, 4, in_features), dtype=jnp.bfloat16)
    w16, b16 = weight.astype(jnp.bfloat16), bias.astype(jnp.bfloat16)
    out16 = simple_linear(x3, w16, b16)
    logits16 = jax.block_until_ready(out16["logits"])
    ref16 = (x3.astype(jnp.float32) @ w16.astype(jnp.float32).T
             + b16.astype(jnp.float32))
    assert logits16.shape == (2, 4, out_features)
    assert jnp.allclose(logits16.astype(jnp.float32), ref16, atol=5e-2, rtol=5e-2)

    print("KERNEL_OK")
</pallas_src>

<mosaic_0001>
module attributes {stable_mosaic.version = 11 : i64} {
  func.func @_linear_kernel(%arg0: i32, %arg1: i32, %arg2: i32, %arg3: memref<8x128xf32, #tpu.memory_space<vmem>>, %arg4: memref<128x128xf32, #tpu.memory_space<vmem>>, %arg5: memref<1x128xf32, #tpu.memory_space<vmem>>, %arg6: memref<8x128xf32, #tpu.memory_space<vmem>>) attributes {dimension_semantics = [#tpu.dimension_semantics<parallel>, #tpu.dimension_semantics<parallel>, #tpu.dimension_semantics<arbitrary>], iteration_bounds = array<i64: 1, 1, 1>, scalar_prefetch = 0 : i64, scratch_operands = 0 : i64, tpu.core_type = #tpu.core_type<tc>, window_params = [{transform_indices = @transform_0, window_bounds = array<i64: 8, 128>}, {transform_indices = @transform_1, window_bounds = array<i64: 128, 128>}, {transform_indices = @transform_2, window_bounds = array<i64: 1, 128>}, {transform_indices = @transform_3, window_bounds = array<i64: 8, 128>}]} {
    %c0_i32 = arith.constant 0 : i32
    %0 = arith.cmpi eq, %arg2, %c0_i32 : i32
    %1 = arith.extui %0 : i1 to i32
    %c0_i32_0 = arith.constant 0 : i32
    %2 = arith.cmpi ne, %1, %c0_i32_0 : i32
    scf.if %2 {
      %cst_10 = arith.constant 0.000000e+00 : f32
      %12 = vector.broadcast %cst_10 : f32 to vector<8x128xf32>
      %c0_11 = arith.constant 0 : index
      %c0_12 = arith.constant 0 : index
      %13 = vector.load %arg6[%c0_11, %c0_12] : memref<8x128xf32, #tpu.memory_space<vmem>>, vector<8x128xf32>
      tpu.vector_store %arg6[%c0_11, %c0_12], %12 {strides = array<i32>} : memref<8x128xf32, #tpu.memory_space<vmem>>, vector<8x128xf32>,
    } else {
    }
    %c0 = arith.constant 0 : index
    %c0_1 = arith.constant 0 : index
    %3 = vector.load %arg6[%c0, %c0_1] : memref<8x128xf32, #tpu.memory_space<vmem>>, vector<8x128xf32>
    %c0_2 = arith.constant 0 : index
    %c0_3 = arith.constant 0 : index
    %4 = vector.load %arg3[%c0_2, %c0_3] : memref<8x128xf32, #tpu.memory_space<vmem>>, vector<8x128xf32>
    %c0_4 = arith.constant 0 : index
    %c0_5 = arith.constant 0 : index
    %5 = vector.load %arg4[%c0_4, %c0_5] : memref<128x128xf32, #tpu.memory_space<vmem>>, vector<128x128xf32>
    %cst = arith.constant dense<0.000000e+00> : vector<8x128xf32>
    %6 = tpu.matmul %4, %5, %cst {dimension_numbers = #tpu.dot_dimension_numbers<[1], [0], [0], [1], [0, 0, 1, 1], [], []>} : vector<8x128xf32>, vector<128x128xf32>, vector<8x128xf32> -> vector<8x128xf32>
    %7 = arith.addf %3, %6 : vector<8x128xf32>
    %c0_6 = arith.constant 0 : index
    %c0_7 = arith.constant 0 : index
    %8 = vector.load %arg6[%c0_6, %c0_7] : memref<8x128xf32, #tpu.memory_space<vmem>>, vector<8x128xf32>
    tpu.vector_store %arg6[%c0_6, %c0_7], %7 {strides = array<i32>} : memref<8x128xf32, #tpu.memory_space<vmem>>, vector<8x128xf32>,
    %c0_i32_8 = arith.constant 0 : i32
    %9 = arith.cmpi eq, %arg2, %c0_i32_8 : i32
    %10 = arith.extui %9 : i1 to i32
    %c0_i32_9 = arith.constant 0 : i32
    %11 = arith.cmpi ne, %10, %c0_i32_9 : i32
    scf.if %11 {
      %c0_10 = arith.constant 0 : index
      %c0_11 = arith.constant 0 : index
      %12 = vector.load %arg6[%c0_10, %c0_11] : memref<8x128xf32, #tpu.memory_space<vmem>>, vector<8x128xf32>
      %c0_12 = arith.constant 0 : index
      %c0_13 = arith.constant 0 : index
      %13 = vector.load %arg5[%c0_12, %c0_13] : memref<1x128xf32, #tpu.memory_space<vmem>>, vector<1x128xf32>
      %14 = vector.broadcast %13 : vector<1x128xf32> to vector<8x128xf32>
      %15 = arith.addf %12, %14 : vector<8x128xf32>
      %c0_14 = arith.constant 0 : index
      %c0_15 = arith.constant 0 : index
      %16 = vector.load %arg6[%c0_14, %c0_15] : memref<8x128xf32, #tpu.memory_space<vmem>>, vector<8x128xf32>
      tpu.vector_store %arg6[%c0_14, %c0_15], %15 {strides = array<i32>} : memref<8x128xf32, #tpu.memory_space<vmem>>, vector<8x128xf32>,
    } else {
    }
    return
  }
  func.func @transform_0(%arg0: i32, %arg1: i32, %arg2: i32) -> (i32, i32) {
    %c0_i32 = arith.constant 0 : i32
    return %arg0, %arg2 : i32, i32
  }
  func.func @transform_1(%arg0: i32, %arg1: i32, %arg2: i32) -> (i32, i32) {
    %c0_i32 = arith.constant 0 : i32
    return %arg2, %arg1 : i32, i32
  }
  func.func @transform_2(%arg0: i32, %arg1: i32, %arg2: i32) -> (i32, i32) {
    %c0_i32 = arith.constant 0 : i32
    %c0_i32_0 = arith.constant 0 : i32
    return %c0_i32, %arg1 : i32, i32
  }
  func.func @transform_3(%arg0: i32, %arg1: i32, %arg2: i32) -> (i32, i32) {
    %c0_i32 = arith.constant 0 : i32
    return %arg0, %arg1 : i32, i32
  }
}

</mosaic_0001>

<llo_original>
// kernel: tpu_custom_call.1
$region0: #{tpu_custom_call.1}
  #allocation0 [shape = 'u32[]', space=smem, size = 0x4, offset = 0x4, fixed_abs, tag = 'smem constant byte address 0x4 - core index']
  #allocation1 [shape = 'u32[144,128]{1,0:T(1,128)}', space=vmem, size = 0x12000, scoped, tag = 'internal scratch']
  %s0 = inlined_call_operand.hbm [shape: f32[8,128], index: 0, kind: input, shape index: {}]
  %s1 = inlined_call_operand.hbm [shape: f32[128,128], index: 1, kind: input, shape index: {}]
  %s2 = inlined_call_operand.vmem [shape: f32[1,128], index: 2, kind: input, shape index: {}]
  %s3 = inlined_call_operand.hbm [shape: f32[8,128], index: 3, kind: output, shape index: {}]
  %s4 = sld [smem:[#allocation0]]
  $region38: #{tpu_custom_call.1} parent=0
    _
  %s6 = ssub.s32 1, %s4
  %s7 = scalar_select 0, %s6, %s4
  $region1: #{tpu_custom_call.1} parent=0
    #allocation2 [shape = 'u8[4096]{0}', space=vmem, size = 0x1000, scoped, tag = 'input window, operand 0, single buffered']
    #allocation3 [shape = 's32[1]{0}', space=sflag, size = 0x4, scoped, tag = 'scoped memory for tpu_custom_call.1']
    #allocation4 [shape = 's32[1]{0}', space=sflag, size = 0x4, scoped, tag = 'scoped memory for tpu_custom_call.1']
    #allocation5 [shape = 'u8[65536]{0}', space=vmem, size = 0x10000, scoped, tag = 'input window, operand 1, single buffered']
    #allocation6 [shape = 's32[1]{0}', space=sflag, size = 0x4, scoped, tag = 'scoped memory for tpu_custom_call.1']
    #allocation7 [shape = 'u8[4096]{0}', space=vmem, size = 0x1000, scoped, tag = 'output window, operand 0, single buffered']
    %8 = vsyncpa [#allocation3], 0
    %9 = vsyncpa [#allocation6], 0
    %10 = vsyncpa [#allocation4], 0
    // Predicated region
    $region2: #{tpu_custom_call.1} parent=1 // pred_check
      _
    $region3: #{tpu_custom_call.1} parent=1 // pred_check_branch
      %12 = sbr.rel (0) target = $region5
    $region4: #{tpu_custom_call.1} parent=1 // pred_region
      %s14 = ssub.s32 128, 128
      %15 = vsyncadd [#allocation3], %s14
      %s17 = sshll.u32 [#allocation2], 4
      %s18 = int_to_ptr.vmem [resolvable:$true] %s17
      %20 = dma.hbm_to_vmem [thread:$0]  %s0, 128, %s18, [#allocation3]
    $region5: #{tpu_custom_call.1} parent=1 // pred_fallthru
      _
    // Predicated region
    $region6: #{tpu_custom_call.1} parent=1 // pred_check
      _
    $region7: #{tpu_custom_call.1} parent=1 // pred_check_branch
      %22 = sbr.rel (0) target = $region9
    $region8: #{tpu_custom_call.1} parent=1 // pred_region
      %s24 = ssub.s32 2048, 2048
      %25 = vsyncadd [#allocation6], %s24
      %s26 = sshll.u32 [#allocation5], 4
      %s27 = int_to_ptr.vmem [resolvable:$true] %s26
      %32 = dma.hbm_to_vmem [thread:$0]  %s1, 2048, %s27, [#allocation6], 128, 128, 8
    $region9: #{tpu_custom_call.1} parent=1 // pred_fallthru
      _
    // Predicated region
    $region10: #{tpu_custom_call.1} parent=1 // pred_check
      _
    $region11: #{tpu_custom_call.1} parent=1 // pred_check_branch
      %34 = sbr.rel (0) target = $region13
    $region12: #{tpu_custom_call.1} parent=1 // pred_region
      _
    $region13: #{tpu_custom_call.1} parent=1 // pred_fallthru
      _
    // Predicated region
    $region14: #{tpu_custom_call.1} parent=1 // pred_check
      _
    $region15: #{tpu_custom_call.1} parent=1 // pred_check_branch
      %36 = sbr.rel (0) target = $region17
    $region16: #{tpu_custom_call.1} parent=1 // pred_region
      %37 = dma.done [#allocation3], 128
    $region17: #{tpu_custom_call.1} parent=1 // pred_fallthru
      _
    // Predicated region
    $region18: #{tpu_custom_call.1} parent=1 // pred_check
      _
    $region19: #{tpu_custom_call.1} parent=1 // pred_check_branch
      %39 = sbr.rel (0) target = $region21
    $region20: #{tpu_custom_call.1} parent=1 // pred_region
      %40 = dma.done [#allocation6], 2048
    $region21: #{tpu_custom_call.1} parent=1 // pred_fallthru
      _
    %p41 = scmp.eq.s32.totalorder 0, 0
    // Predicated region
    $region22: #{tpu_custom_call.1} parent=1 // pred_check
      %p42 = pneg %p41
    $region23: #{tpu_custom_call.1} parent=1 // pred_check_branch
      %44 = sbr.rel (%p42) target = $region25
    $region24: #{tpu_custom_call.1} parent=1 // pred_region
      %45 = vst [vmem:[#allocation7] sm:$0xff] 0.0
    $region25: #{tpu_custom_call.1} parent=1 // pred_fallthru
      _
    %v46 = vld [vmem:[#allocation7] sm:$0xff]
    %v47 = vld [vmem:[#allocation2] sm:$0xff]
    %v48 = vld [vmem:[#allocation5] sm:$0xff]
    %v49 = vld [vmem:[#allocation5 + $0x8] sm:$0xff]
    %v50 = vld [vmem:[#allocation5 + $0x10] sm:$0xff]
    %v51 = vld [vmem:[#allocation5 + $0x18] sm:$0xff]
    %v52 = vld [vmem:[#allocation5 + $0x20] sm:$0xff]
    %v53 = vld [vmem:[#allocation5 + $0x28] sm:$0xff]
    %v54 = vld [vmem:[#allocation5 + $0x30] sm:$0xff]
    %v55 = vld [vmem:[#allocation5 + $0x38] sm:$0xff]
    %v56 = vld [vmem:[#allocation5 + $0x40] sm:$0xff]
    %v57 = vld [vmem:[#allocation5 + $0x48] sm:$0xff]
    %v58 = vld [vmem:[#allocation5 + $0x50] sm:$0xff]
    %v59 = vld [vmem:[#allocation5 + $0x58] sm:$0xff]
    %v60 = vld [vmem:[#allocation5 + $0x60] sm:$0xff]
    %v61 = vld [vmem:[#allocation5 + $0x68] sm:$0xff]
    %v62 = vld [vmem:[#allocation5 + $0x70] sm:$0xff]
    %v63 = vld [vmem:[#allocation5 + $0x78] sm:$0xff]
    %64 = vmatprep.subr.mxu0 0.0
    %65 = vmatpush1.msra.mxu0 %v48
    %66 = vmatprep.subr.mxu0 0.0
    %67 = vmatpush1.msra.mxu0 %v49
    %68 = vmatprep.subr.mxu0 0.0
    %69 = vmatpush1.msra.mxu0 %v50
    %70 = vmatprep.subr.mxu0 0.0
    %71 = vmatpush1.msra.mxu0 %v51
    %72 = vmatprep.subr.mxu0 0.0
    %73 = vmatpush1.msra.mxu0 %v52
    %74 = vmatprep.subr.mxu0 0.0
    %75 = vmatpush1.msra.mxu0 %v53
    %76 = vmatprep.subr.mxu0 0.0
    %77 = vmatpush1.msra.mxu0 %v54
    %78 = vmatprep.subr.mxu0 0.0
    %79 = vmatpush1.msra.mxu0 %v55
    %80 = vmatprep.subr.mxu0 0.0
    %81 = vmatpush1.msra.mxu0 %v56
    %82 = vmatprep.subr.mxu0 0.0
    %83 = vmatpush1.msra.mxu0 %v57
    %84 = vmatprep.subr.mxu0 0.0
    %85 = vmatpush1.msra.mxu0 %v58
    %86 = vmatprep.subr.mxu0 0.0
    %87 = vmatpush1.msra.mxu0 %v59
    %88 = vmatprep.subr.mxu0 0.0
    %89 = vmatpush1.msra.mxu0 %v60
    %90 = vmatprep.subr.mxu0 0.0
    %91 = vmatpush1.msra.mxu0 %v61
    %92 = vmatprep.subr.mxu0 0.0
    %93 = vmatpush1.msra.mxu0 %v62
    %94 = vmatprep.subr.mxu0 0.0
    %95 = vmatpush1.msra.mxu0 %v63
    %96 = vmatprep.subr.mxu0 0.0
    %97 = vmatpush1.msra.mxu0 0.0
    %98 = vmatprep.subr.mxu0 0.0
    %99 = vmatpush1.msra.mxu0 0.0
    %100 = vmatprep.subr.mxu0 0.0
    %101 = vmatpush1.msra.mxu0 0.0
    %102 = vmatprep.subr.mxu0 0.0
    %103 = vmatpush1.msra.mxu0 0.0
    %104 = vmatprep.subr.mxu0 0.0
    %105 = vmatpush1.msra.mxu0 0.0
    %106 = vmatprep.subr.mxu0 0.0
    %107 = vmatpush1.msra.mxu0 0.0
    %108 = vmatprep.subr.mxu0 0.0
    %109 = vmatpush1.msra.mxu0 0.0
    %110 = vmatprep.subr.mxu0 0.0
    %111 = vmatpush1.msra.mxu0 0.0
    %112 = vmatprep.subr.mxu0 0.0
    %113 = vmatpush1.msra.mxu0 0.0
    %114 = vmatprep.subr.mxu0 0.0
    %115 = vmatpush1.msra.mxu0 0.0
    %116 = vmatprep.subr.mxu0 0.0
    %117 = vmatpush1.msra.mxu0 0.0
    %118 = vmatprep.subr.mxu0 0.0
    %119 = vmatpush1.msra.mxu0 0.0
    %120 = vmatprep.subr.mxu0 0.0
    %121 = vmatpush1.msra.mxu0 0.0
    %122 = vmatprep.subr.mxu0 0.0
    %123 = vmatpush1.msra.mxu0 0.0
    %124 = vmatprep.subr.mxu0 0.0
    %125 = vmatpush1.msra.mxu0 0.0
    %126 = vmatprep.subr.mxu0 0.0
    %127 = vmatpush1.msra.mxu0 0.0
    %128 = vmatprep.mubr.f32.mxu0 0.0
    %129 = vmatmul.mubr.f32.gmra.mrb[0].mxu0 %v47
    %v130 = vpop.f32.mrb[0].mxu0
    %v131 = vadd.f32 0.0, %v130
    %v132 = vpop.f32.mrb[0].mxu0
    %133 = vdwg.mxu0
    %v134 = vadd.f32 %v46, %v131
    %135 = vst [vmem:[#allocation7] sm:$0xff] %v134
    // Predicated region
    $region26: #{tpu_custom_call.1} parent=1 // pred_check
      %p136 = pneg %p41
    $region27: #{tpu_custom_call.1} parent=1 // pred_check_branch
      %138 = sbr.rel (%p136) target = $region29
    $region28: #{tpu_custom_call.1} parent=1 // pred_region
      %v139 = vld [vmem:[#allocation7] sm:$0xff]
      %v140 = vld [vmem:[%s2] sm:$0x1]
      %v142 = vlaneseq
      %v143 = vshrl.u32 %v142, 7
      %v144 = vsub.s32 0, %v143
      %v145 = vrot.slane %v140, %v144
      %v147 = vadd.f32 %v139, %v145
      %148 = vst [vmem:[#allocation7] sm:$0xff] %v147
    $region29: #{tpu_custom_call.1} parent=1 // pred_fallthru
      _
    // Predicated region
    $region30: #{tpu_custom_call.1} parent=1 // pred_check
      _
    $region31: #{tpu_custom_call.1} parent=1 // pred_check_branch
      %150 = sbr.rel (0) target = $region33
    $region32: #{tpu_custom_call.1} parent=1 // pred_region
      %s152 = ssub.s32 128, 128
      %153 = vsyncadd [#allocation4], %s152
      %s155 = sshll.u32 [#allocation7], 4
      %s156 = int_to_ptr.vmem [resolvable:$true] %s155
      %158 = dma.vmem_to_hbm [thread:$0]  %s156, 128, %s3, [#allocation4]
    $region33: #{tpu_custom_call.1} parent=1 // pred_fallthru
      _
    // Predicated region
    $region34: #{tpu_custom_call.1} parent=1 // pred_check
      _
    $region35: #{tpu_custom_call.1} parent=1 // pred_check_branch
      %160 = sbr.rel (0) target = $region37
    $region36: #{tpu_custom_call.1} parent=1 // pred_region
      %161 = dma.done [#allocation4], 128
    $region37: #{tpu_custom_call.1} parent=1 // pred_fallthru
      _
    %162 = vsyncpa [#allocation3], 1
    %163 = vsyncpa [#allocation6], 1
    %164 = vsyncpa [#allocation4], 1

</llo_original>
